<compile_context>
chip_gen: v7x
topology: tpu7x:2x2x1
jax: 0.10.0
libtpu: 0.0.40
codegen_flags: <defaults>
</compile_context>

<pallas_src>
import functools

import jax
import jax.numpy as jnp
from jax import lax
from jax.experimental import pallas as pl
from jax.experimental.pallas import tpu as pltpu


# ---------------------------------------------------------------------------
# Tiling helpers
# ---------------------------------------------------------------------------

_TM_CAP = 512    # sublane dim of x / out
_TN_CAP = 512    # lane dim of out, sublane dim of W
_TK_CAP = 1024   # contraction dim (lane dim of x and W)


def _cdiv(a: int, b: int) -> int:
    return -(-a // b)


def _round_up(x: int, m: int) -> int:
    return _cdiv(x, m) * m


def _balanced_tile(dim: int, cap: int, align: int, min_tiles: int = 1) -> int:
    """Split `dim` into roughly equal tiles, each a multiple of `align` and at
    most `cap`.  If a single block suffices (or dim <= align), use the full
    dim as the block size -- Pallas allows a block dim equal to the array dim
    even when it is not (8,128)-aligned."""
    nt = max(_cdiv(dim, cap), min_tiles)
    if nt <= 1 or dim <= align:
        return dim
    tile = _round_up(_cdiv(dim, nt), align)
    return min(tile, dim)


# ---------------------------------------------------------------------------
# Kernel
# ---------------------------------------------------------------------------

def _linear_kernel(x_ref, w_ref, b_ref, o_ref):
    # x_ref: (tm, tk), w_ref: (tn, tk) [PyTorch (out, in) layout],
    # b_ref: (1, tn),  o_ref: (tm, tn) -- resident across the k axis.
    kk = pl.program_id(2)

    @pl.when(kk == 0)
    def _init():
        # Bias is the k==0 initializer -> added exactly once, no scratch,
        # no finalize copy.
        o_ref[...] = jnp.broadcast_to(b_ref[...], o_ref.shape).astype(o_ref.dtype)

    # Contract the last dims of both operands: (tm, tk) x (tn, tk) -> (tm, tn).
    o_ref[...] += lax.dot_general(
        x_ref[...], w_ref[...],
        dimension_numbers=(((1,), (1,)), ((), ())),
        preferred_element_type=jnp.float32,
    ).astype(o_ref.dtype)


# ---------------------------------------------------------------------------
# Wrapper
# ---------------------------------------------------------------------------

@functools.partial(jax.jit, static_argnames=("use_bias",))
def linear_forward(x, weight, bias=None, *, use_bias: bool = True):
    """Pallas equivalent of LinearModel.forward.

    Args:
      x:      (N, in_features)            float32
      weight: (out_features, in_features) float32 (PyTorch layout, NOT transposed)
      bias:   (out_features,)             float32 (ignored if use_bias=False)
    Returns:
      (N, out_features) float32
    """
    n, k = x.shape
    m, k_w = weight.shape
    assert k == k_w, "in_features mismatch between x and weight"

    # --- tile selection (balanced, no wrapper padding of N / M) -------------
    tm = _balanced_tile(n, _TM_CAP, 8)
    tn = _balanced_tile(m, _TN_CAP, 128)

    if k <= _TK_CAP:
        tk, kp = k, k                       # single full-dim K block, no pad
    else:
        nk = _cdiv(k, _TK_CAP)
        tk = _round_up(_cdiv(k, nk), 128)
        kp = _round_up(k, tk)               # zero-pad K (correctness-critical)

    grid_i = _cdiv(n, tm)
    grid_j = _cdiv(m, tn)
    grid_k = kp // tk

    # v7x megacore: make sure at least 2 tiles exist on a parallel axis when
    # the problem is big enough (split N -> waste is at most 7 rows).
    if grid_i * grid_j == 1 and n >= 16:
        tm = _balanced_tile(n, _TM_CAP, 8, min_tiles=2)
        grid_i = _cdiv(n, tm)

    # --- operand prep (only the K pad; N/M stay unpadded) -------------------
    if kp != k:
        x_in = jnp.pad(x, ((0, 0), (0, kp - k)))
        w_in = jnp.pad(weight, ((0, 0), (0, kp - k)))
    else:
        x_in, w_in = x, weight

    if use_bias and bias is not None:
        b_in = bias.astype(jnp.float32).reshape(1, m)
    else:
        b_in = jnp.zeros((1, m), dtype=jnp.float32)

    # --- specs / grid --------------------------------------------------------
    x_spec = pl.BlockSpec((tm, tk), lambda i, j, kk: (i, kk))
    w_spec = pl.BlockSpec((tn, tk), lambda i, j, kk: (j, kk))
    b_spec = pl.BlockSpec((1, tn), lambda i, j, kk: (0, j))
    o_spec = pl.BlockSpec((tm, tn), lambda i, j, kk: (i, j))

    cost = pl.CostEstimate(
        flops=2 * (grid_i * tm) * kp * (grid_j * tn),
        transcendentals=0,
        # x re-streamed once per j tile, W once per i tile, output written once.
        bytes_accessed=4 * (grid_j * n * kp + grid_i * m * kp + n * m + grid_i * m),
    )
    cparams = pltpu.CompilerParams(
        dimension_semantics=("parallel", "parallel", "arbitrary"),
        vmem_limit_bytes=32 * 1024 * 1024,
    )

    out = pl.pallas_call(
        _linear_kernel,
        out_shape=jax.ShapeDtypeStruct((n, m), jnp.float32),
        grid_spec=pltpu.PrefetchScalarGridSpec(
            num_scalar_prefetch=0,
            grid=(grid_i, grid_j, grid_k),
            in_specs=[x_spec, w_spec, b_spec],
            out_specs=o_spec,
        ),
        compiler_params=cparams,
        cost_estimate=cost,
    )(x_in, w_in, b_in)

    return out


# ---------------------------------------------------------------------------
# Param init matching torch.nn.Linear defaults
# ---------------------------------------------------------------------------

def init_linear_params(key, in_features: int, out_features: int, bias: bool):
    """U(-1/sqrt(in_features), 1/sqrt(in_features)) for weight and bias."""
    kw, kb = jax.random.split(key)
    bound = 1.0 / jnp.sqrt(jnp.float32(in_features))
    weight = jax.random.uniform(
        kw, (out_features, in_features), dtype=jnp.float32, minval=-bound, maxval=bound
    )
    b = (
        jax.random.uniform(kb, (out_features,), dtype=jnp.float32,
                           minval=-bound, maxval=bound)
        if bias
        else jnp.zeros((out_features,), dtype=jnp.float32)
    )
    return weight, b


# ---------------------------------------------------------------------------
# Self-test
# ---------------------------------------------------------------------------

if __name__ == "__main__":
    def ref_linear(x, w, b=None):
        y = lax.dot_general(x, w, (((1,), (1,)), ((), ())),
                            precision=lax.Precision.HIGHEST)
        return y if b is None else y + b

    # Small shapes consistent with LinearModel on an equistore block.
    N, IN_F, OUT_F = 8, 32, 16
    key = jax.random.PRNGKey(0)
    kx, kparams = jax.random.split(key)
    x = jax.random.normal(kx, (N, IN_F), dtype=jnp.float32)
    weight, bias = init_linear_params(kparams, IN_F, OUT_F, True)

    y = linear_forward(x, weight, bias, use_bias=True)
    jax.block_until_ready(y)
    assert y.shape == (N, OUT_F)
    assert jnp.allclose(y, ref_linear(x, weight, bias), atol=1e-5, rtol=1e-5)

    # No-bias path.
    y_nb = linear_forward(x, weight, bias, use_bias=False)
    jax.block_until_ready(y_nb)
    assert jnp.allclose(y_nb, ref_linear(x, weight), atol=1e-5, rtol=1e-5)

    # Non-multiple shapes: cdiv grid, masked edge stores, no N/M padding.
    N2, K2, M2 = 600, 384, 272
    kx2, kp2 = jax.random.split(jax.random.PRNGKey(1))
    x2 = jax.random.normal(kx2, (N2, K2), dtype=jnp.float32)
    w2, b2 = init_linear_params(kp2, K2, M2, True)
    y2 = linear_forward(x2, w2, b2, use_bias=True)
    jax.block_until_ready(y2)
    assert jnp.allclose(y2, ref_linear(x2, w2, b2), atol=2e-4, rtol=2e-4)

    # K > tile cap: exercises K zero-pad, multi-step reduction into the
    # resident output block, and the forced 2-way split of the N axis.
    N3, K3, M3 = 136, 1500, 272
    kx3, kp3 = jax.random.split(jax.random.PRNGKey(2))
    x3 = jax.random.normal(kx3, (N3, K3), dtype=jnp.float32)
    w3, b3 = init_linear_params(kp3, K3, M3, True)
    y3 = linear_forward(x3, w3, b3, use_bias=True)
    jax.block_until_ready(y3)
    assert jnp.allclose(y3, ref_linear(x3, w3, b3), atol=2e-4, rtol=2e-4)

    print("KERNEL_OK")
</pallas_src>

<mosaic_0001>
module attributes {stable_mosaic.version = 11 : i64} {
  func.func @_linear_kernel(%arg0: i32, %arg1: i32, %arg2: i32, %arg3: memref<8x32xf32, #tpu.memory_space<vmem>>, %arg4: memref<16x32xf32, #tpu.memory_space<vmem>>, %arg5: memref<1x16xf32, #tpu.memory_space<vmem>>, %arg6: memref<8x16xf32, #tpu.memory_space<vmem>>) attributes {dimension_semantics = [#tpu.dimension_semantics<parallel>, #tpu.dimension_semantics<parallel>, #tpu.dimension_semantics<arbitrary>], iteration_bounds = array<i64: 1, 1, 1>, scalar_prefetch = 0 : i64, scratch_operands = 0 : i64, tpu.core_type = #tpu.core_type<tc>, window_params = [{transform_indices = @transform_0, window_bounds = array<i64: 8, 32>}, {transform_indices = @transform_1, window_bounds = array<i64: 16, 32>}, {transform_indices = @transform_2, window_bounds = array<i64: 1, 16>}, {transform_indices = @transform_3, window_bounds = array<i64: 8, 16>}]} {
    %c0_i32 = arith.constant 0 : i32
    %0 = arith.cmpi eq, %arg2, %c0_i32 : i32
    %1 = arith.extui %0 : i1 to i32
    %c0_i32_0 = arith.constant 0 : i32
    %2 = arith.cmpi ne, %1, %c0_i32_0 : i32
    scf.if %2 {
      %c0_8 = arith.constant 0 : index
      %c0_9 = arith.constant 0 : index
      %9 = vector.load %arg5[%c0_8, %c0_9] : memref<1x16xf32, #tpu.memory_space<vmem>>, vector<1x16xf32>
      %10 = vector.shape_cast %9 : vector<1x16xf32> to vector<1x16xf32>
      %11 = vector.broadcast %10 : vector<1x16xf32> to vector<8x16xf32>
      %c0_10 = arith.constant 0 : index
      %c0_11 = arith.constant 0 : index
      %12 = vector.load %arg6[%c0_10, %c0_11] : memref<8x16xf32, #tpu.memory_space<vmem>>, vector<8x16xf32>
      tpu.vector_store %arg6[%c0_10, %c0_11], %11 {strides = array<i32>} : memref<8x16xf32, #tpu.memory_space<vmem>>, vector<8x16xf32>,
    } else {
    }
    %c0 = arith.constant 0 : index
    %c0_1 = arith.constant 0 : index
    %3 = vector.load %arg6[%c0, %c0_1] : memref<8x16xf32, #tpu.memory_space<vmem>>, vector<8x16xf32>
    %c0_2 = arith.constant 0 : index
    %c0_3 = arith.constant 0 : index
    %4 = vector.load %arg3[%c0_2, %c0_3] : memref<8x32xf32, #tpu.memory_space<vmem>>, vector<8x32xf32>
    %c0_4 = arith.constant 0 : index
    %c0_5 = arith.constant 0 : index
    %5 = vector.load %arg4[%c0_4, %c0_5] : memref<16x32xf32, #tpu.memory_space<vmem>>, vector<16x32xf32>
    %cst = arith.constant dense<0.000000e+00> : vector<8x16xf32>
    %6 = tpu.matmul %4, %5, %cst {dimension_numbers = #tpu.dot_dimension_numbers<[1], [1], [0], [0], [0, 0, 1, 0], [], []>} : vector<8x32xf32>, vector<16x32xf32>, vector<8x16xf32> -> vector<8x16xf32>
    %7 = arith.addf %3, %6 : vector<8x16xf32>
    %c0_6 = arith.constant 0 : index
    %c0_7 = arith.constant 0 : index
    %8 = vector.load %arg6[%c0_6, %c0_7] : memref<8x16xf32, #tpu.memory_space<vmem>>, vector<8x16xf32>
    tpu.vector_store %arg6[%c0_6, %c0_7], %7 {strides = array<i32>} : memref<8x16xf32, #tpu.memory_space<vmem>>, vector<8x16xf32>,
    return
  }
  func.func @transform_0(%arg0: i32, %arg1: i32, %arg2: i32) -> (i32, i32) {
    %c0_i32 = arith.constant 0 : i32
    return %arg0, %arg2 : i32, i32
  }
  func.func @transform_1(%arg0: i32, %arg1: i32, %arg2: i32) -> (i32, i32) {
    %c0_i32 = arith.constant 0 : i32
    return %arg1, %arg2 : i32, i32
  }
  func.func @transform_2(%arg0: i32, %arg1: i32, %arg2: i32) -> (i32, i32) {
    %c0_i32 = arith.constant 0 : i32
    %c0_i32_0 = arith.constant 0 : i32
    return %c0_i32, %arg1 : i32, i32
  }
  func.func @transform_3(%arg0: i32, %arg1: i32, %arg2: i32) -> (i32, i32) {
    %c0_i32 = arith.constant 0 : i32
    return %arg0, %arg1 : i32, i32
  }
}

</mosaic_0001>

<llo_original>
// kernel: linear_forward.1
$region0: #{linear_forward.1}
  #allocation0 [shape = 'u32[]', space=smem, size = 0x4, offset = 0x4, fixed_abs, tag = 'smem constant byte address 0x4 - core index']
  #allocation1 [shape = 'u32[144,128]{1,0:T(1,128)}', space=vmem, size = 0x12000, scoped, tag = 'internal scratch']
  %s0 = inlined_call_operand.hbm [shape: f32[8,32], index: 0, kind: input, shape index: {}]
  %s1 = inlined_call_operand.hbm [shape: f32[16,32], index: 1, kind: input, shape index: {}]
  %s2 = inlined_call_operand.vmem [shape: f32[1,16], index: 2, kind: input, shape index: {}]
  %s3 = inlined_call_operand.hbm [shape: f32[8,16], index: 3, kind: output, shape index: {}]
  %s4 = sld [smem:[#allocation0]]
  $region34: #{linear_forward.1} parent=0
    _
  %s6 = ssub.s32 1, %s4
  %s7 = scalar_select 0, %s6, %s4
  $region1: #{linear_forward.1} parent=0
    #allocation2 [shape = 'u8[4096]{0}', space=vmem, size = 0x1000, scoped, tag = 'input window, operand 0, single buffered']
    #allocation3 [shape = 's32[1]{0}', space=sflag, size = 0x4, scoped, tag = 'scoped memory for linear_forward.1']
    #allocation4 [shape = 's32[1]{0}', space=sflag, size = 0x4, scoped, tag = 'scoped memory for linear_forward.1']
    #allocation5 [shape = 'u8[8192]{0}', space=vmem, size = 0x2000, scoped, tag = 'input window, operand 1, single buffered']
    #allocation6 [shape = 's32[1]{0}', space=sflag, size = 0x4, scoped, tag = 'scoped memory for linear_forward.1']
    #allocation7 [shape = 'u8[4096]{0}', space=vmem, size = 0x1000, scoped, tag = 'output window, operand 0, single buffered']
    %8 = vsyncpa [#allocation3], 0
    %9 = vsyncpa [#allocation6], 0
    %10 = vsyncpa [#allocation4], 0
    // Predicated region
    $region2: #{linear_forward.1} parent=1 // pred_check
      _
    $region3: #{linear_forward.1} parent=1 // pred_check_branch
      %12 = sbr.rel (0) target = $region5
    $region4: #{linear_forward.1} parent=1 // pred_region
      %s14 = ssub.s32 128, 128
      %15 = vsyncadd [#allocation3], %s14
      %s17 = sshll.u32 [#allocation2], 4
      %s18 = int_to_ptr.vmem [resolvable:$true] %s17
      %20 = dma.hbm_to_vmem [thread:$0]  %s0, 128, %s18, [#allocation3]
    $region5: #{linear_forward.1} parent=1 // pred_fallthru
      _
    // Predicated region
    $region6: #{linear_forward.1} parent=1 // pred_check
      _
    $region7: #{linear_forward.1} parent=1 // pred_check_branch
      %22 = sbr.rel (0) target = $region9
    $region8: #{linear_forward.1} parent=1 // pred_region
      %s24 = ssub.s32 256, 256
      %25 = vsyncadd [#allocation6], %s24
      %s26 = sshll.u32 [#allocation5], 4
      %s27 = int_to_ptr.vmem [resolvable:$true] %s26
      %32 = dma.hbm_to_vmem [thread:$0]  %s1, 256, %s27, [#allocation6], 128, 128, 8
    $region9: #{linear_forward.1} parent=1 // pred_fallthru
      _
    // Predicated region
    $region10: #{linear_forward.1} parent=1 // pred_check
      _
    $region11: #{linear_forward.1} parent=1 // pred_check_branch
      %34 = sbr.rel (0) target = $region13
    $region12: #{linear_forward.1} parent=1 // pred_region
      _
    $region13: #{linear_forward.1} parent=1 // pred_fallthru
      _
    // Predicated region
    $region14: #{linear_forward.1} parent=1 // pred_check
      _
    $region15: #{linear_forward.1} parent=1 // pred_check_branch
      %36 = sbr.rel (0) target = $region17
    $region16: #{linear_forward.1} parent=1 // pred_region
      %37 = dma.done [#allocation3], 128
    $region17: #{linear_forward.1} parent=1 // pred_fallthru
      _
    // Predicated region
    $region18: #{linear_forward.1} parent=1 // pred_check
      _
    $region19: #{linear_forward.1} parent=1 // pred_check_branch
      %39 = sbr.rel (0) target = $region21
    $region20: #{linear_forward.1} parent=1 // pred_region
      %40 = dma.done [#allocation6], 256
    $region21: #{linear_forward.1} parent=1 // pred_fallthru
      _
    %p41 = scmp.eq.s32.totalorder 0, 0
    // Predicated region
    $region22: #{linear_forward.1} parent=1 // pred_check
      %p42 = pneg %p41
    $region23: #{linear_forward.1} parent=1 // pred_check_branch
      %44 = sbr.rel (%p42) target = $region25
    $region24: #{linear_forward.1} parent=1 // pred_region
      %v45 = vld [vmem:[%s2] sm:$0x1]
      %v47 = vlaneseq
      %v48 = vshrl.u32 %v47, 7
      %v49 = vsub.s32 0, %v48
      %v50 = vrot.slane %v45, %v49
      %vm52 = vcmask 130048
      %53 = vst.msk [vmem:[#allocation7] sm:$0xff] %vm52, %v50
    $region25: #{linear_forward.1} parent=1 // pred_fallthru
      _
    %v54 = vld [vmem:[#allocation7] sm:$0xff]
    %v55 = vld [vmem:[#allocation2] sm:$0xff]
    %v56 = vld [vmem:[#allocation5] sm:$0xff]
    %v57 = vld [vmem:[#allocation5 + $0x8] sm:$0xff]
    %vm58 = vcmask 261120
    %v60 = vsel %vm58, %v55, 0
    %v63 = vsel %vm58, %v56, 0
    %v66 = vsel %vm58, %v57, 0
    %68 = vmatprep.subr.mxu0 0.0
    %69 = vmatpush1.xpose.msra.mxu0 %v63
    %70 = vmatprep.subr.mxu0 0.0
    %71 = vmatpush1.xpose.msra.mxu0 %v66
    %72 = vmatprep.subr.mxu0 0.0
    %73 = vmatpush1.xpose.msra.mxu0 0.0
    %74 = vmatprep.subr.mxu0 0.0
    %75 = vmatpush1.xpose.msra.mxu0 0.0
    %76 = vmatprep.subr.mxu0 0.0
    %77 = vmatpush1.xpose.msra.mxu0 0.0
    %78 = vmatprep.subr.mxu0 0.0
    %79 = vmatpush1.xpose.msra.mxu0 0.0
    %80 = vmatprep.subr.mxu0 0.0
    %81 = vmatpush1.xpose.msra.mxu0 0.0
    %82 = vmatprep.subr.mxu0 0.0
    %83 = vmatpush1.xpose.msra.mxu0 0.0
    %84 = vmatprep.subr.mxu0 0.0
    %85 = vmatpush1.xpose.msra.mxu0 0.0
    %86 = vmatprep.subr.mxu0 0.0
    %87 = vmatpush1.xpose.msra.mxu0 0.0
    %88 = vmatprep.subr.mxu0 0.0
    %89 = vmatpush1.xpose.msra.mxu0 0.0
    %90 = vmatprep.subr.mxu0 0.0
    %91 = vmatpush1.xpose.msra.mxu0 0.0
    %92 = vmatprep.subr.mxu0 0.0
    %93 = vmatpush1.xpose.msra.mxu0 0.0
    %94 = vmatprep.subr.mxu0 0.0
    %95 = vmatpush1.xpose.msra.mxu0 0.0
    %96 = vmatprep.subr.mxu0 0.0
    %97 = vmatpush1.xpose.msra.mxu0 0.0
    %98 = vmatprep.subr.mxu0 0.0
    %99 = vmatpush1.xpose.msra.mxu0 0.0
    %100 = vmatprep.subr.mxu0 0.0
    %101 = vmatpush1.xpose.msra.mxu0 0.0
    %102 = vmatprep.subr.mxu0 0.0
    %103 = vmatpush1.xpose.msra.mxu0 0.0
    %104 = vmatprep.subr.mxu0 0.0
    %105 = vmatpush1.xpose.msra.mxu0 0.0
    %106 = vmatprep.subr.mxu0 0.0
    %107 = vmatpush1.xpose.msra.mxu0 0.0
    %108 = vmatprep.subr.mxu0 0.0
    %109 = vmatpush1.xpose.msra.mxu0 0.0
    %110 = vmatprep.subr.mxu0 0.0
    %111 = vmatpush1.xpose.msra.mxu0 0.0
    %112 = vmatprep.subr.mxu0 0.0
    %113 = vmatpush1.xpose.msra.mxu0 0.0
    %114 = vmatprep.subr.mxu0 0.0
    %115 = vmatpush1.xpose.msra.mxu0 0.0
    %116 = vmatprep.subr.mxu0 0.0
    %117 = vmatpush1.xpose.msra.mxu0 0.0
    %118 = vmatprep.subr.mxu0 0.0
    %119 = vmatpush1.xpose.msra.mxu0 0.0
    %120 = vmatprep.subr.mxu0 0.0
    %121 = vmatpush1.xpose.msra.mxu0 0.0
    %122 = vmatprep.subr.mxu0 0.0
    %123 = vmatpush1.xpose.msra.mxu0 0.0
    %124 = vmatprep.subr.mxu0 0.0
    %125 = vmatpush1.xpose.msra.mxu0 0.0
    %126 = vmatprep.subr.mxu0 0.0
    %127 = vmatpush1.xpose.msra.mxu0 0.0
    %128 = vmatprep.subr.mxu0 0.0
    %129 = vmatpush1.xpose.msra.mxu0 0.0
    %130 = vmatprep.subr.mxu0 0.0
    %131 = vmatpush1.xpose.msra.mxu0 0.0
    %132 = vmatprep.mubr.f32.mxu0 0.0
    %133 = vmatmul.mubr.f32.gmra.mrb[0].mxu0 %v60
    %v134 = vpop.f32.mrb[0].mxu0
    %v135 = vadd.f32 0.0, %v134
    %v136 = vpop.f32.mrb[0].mxu0
    %137 = vdwg.mxu0
    %v138 = vadd.f32 %v54, %v135
    %vm139 = vcmask 130048
    %140 = vst.msk [vmem:[#allocation7] sm:$0xff] %vm139, %v138
    // Predicated region
    $region26: #{linear_forward.1} parent=1 // pred_check
      _
    $region27: #{linear_forward.1} parent=1 // pred_check_branch
      %142 = sbr.rel (0) target = $region29
    $region28: #{linear_forward.1} parent=1 // pred_region
      %s144 = ssub.s32 128, 128
      %145 = vsyncadd [#allocation4], %s144
      %s147 = sshll.u32 [#allocation7], 4
      %s148 = int_to_ptr.vmem [resolvable:$true] %s147
      %150 = dma.vmem_to_hbm [thread:$0]  %s148, 128, %s3, [#allocation4]
    $region29: #{linear_forward.1} parent=1 // pred_fallthru
      _
    // Predicated region
    $region30: #{linear_forward.1} parent=1 // pred_check
      _
    $region31: #{linear_forward.1} parent=1 // pred_check_branch
      %152 = sbr.rel (0) target = $region33
    $region32: #{linear_forward.1} parent=1 // pred_region
      %153 = dma.done [#allocation4], 128
    $region33: #{linear_forward.1} parent=1 // pred_fallthru
      _
    %154 = vsyncpa [#allocation3], 1
    %155 = vsyncpa [#allocation6], 1
    %156 = vsyncpa [#allocation4], 1

</llo_original>
